<compile_context>
chip_gen: v7x
topology: tpu7x:2x2x1
jax: 0.10.0
libtpu: 0.0.40
codegen_flags: <defaults>
</compile_context>

<pallas_src>
import jax
import jax.numpy as jnp
from jax.experimental import pallas as pl
from jax.experimental.pallas import tpu as pltpu

LANES = 128  # minimum lane width; keeps the zero-copy path for any N % 128 == 0


def elm_kernel(params_ref, x_ref, o_ref):
    # params_ref: SMEM (3, H) f32 -- rows: [w1, b1, w2]
    # x_ref:      VMEM (tile_rows, LANES) f32 -- batch tile on (sublane, lane)
    # o_ref:      VMEM (tile_rows, LANES) f32
    H = params_ref.shape[1]
    x = x_ref[...]

    def term(j):
        # scalar-broadcast multiply/add (VPU) + tanh (EUP) + scale (VPU)
        return params_ref[2, j] * jnp.tanh(x * params_ref[0, j] + params_ref[1, j])

    # Initialize accumulators from the first terms (no zeros materialization,
    # one fewer full-tile add); two accumulators (even/odd j) break the
    # H-deep serial add chain per vreg.
    acc0 = term(0)
    if H == 1:
        o_ref[...] = acc0
        return
    acc1 = term(1)
    for j in range(2, H, 2):
        acc0 = acc0 + term(j)
    for j in range(3, H, 2):
        acc1 = acc1 + term(j)
    o_ref[...] = acc0 + acc1


def _round_up(v, m):
    return ((v + m - 1) // m) * m


def enhanced_elm_forward(x, w1, b1, w2, *, block_rows=4096):
    """x: (N, 1) f32; w1: (H, 1); b1: (H,); w2: (1, H) -> (N, 1) f32."""
    N = x.shape[0]
    H = w1.shape[0]

    # Pack all parameters into one small SMEM-resident array (scalar prefetch).
    params = jnp.stack(
        [
            w1.reshape(H).astype(jnp.float32),
            b1.reshape(H).astype(jnp.float32),
            w2.reshape(H).astype(jnp.float32),
        ],
        axis=0,
    )  # (3, H)

    # Lane-dense view: (N, 1) -> (N,) -> (rows, 128).  Free bitcasts when
    # N % 128 == 0; otherwise pad only the final partial 128-lane row.
    xf = x.reshape(-1).astype(jnp.float32)
    rows = pl.cdiv(N, LANES)
    n_pad = rows * LANES
    padded = n_pad != N
    if padded:
        xf = jnp.pad(xf, (0, n_pad - N))  # rare misaligned fallback (1 extra pass)
    x2d = xf.reshape(rows, LANES)

    # Tile-rows heuristic: ~2 MiB blocks, but guarantee >= 2 grid steps when
    # there are >= 16 rows so v7x's second TensorCore is used.
    if rows >= 16:
        tr = min(block_rows, _round_up(pl.cdiv(rows, 2), 8))
    else:
        tr = rows  # single step; block equals the full array (always legal)
    grid = (pl.cdiv(rows, tr),)  # ragged last row-block is masked by Pallas

    cost = pl.CostEstimate(
        flops=4 * H * N,
        transcendentals=H * N,
        bytes_accessed=8 * N + 12 * H,
    )

    out2d = pl.pallas_call(
        elm_kernel,
        out_shape=jax.ShapeDtypeStruct((rows, LANES), jnp.float32),
        grid_spec=pltpu.PrefetchScalarGridSpec(
            num_scalar_prefetch=1,                              # params -> SMEM
            grid=grid,
            in_specs=[pl.BlockSpec((tr, LANES), lambda i, p: (i, 0))],
            out_specs=pl.BlockSpec((tr, LANES), lambda i, p: (i, 0)),
        ),
        compiler_params=pltpu.CompilerParams(
            dimension_semantics=("parallel",)),                 # shard batch across TCs
        cost_estimate=cost,
    )(params, x2d)

    out = out2d.reshape(-1)
    if padded:
        out = out[:N]
    return out.reshape(N, 1)


def init_params(key, hidden_size=8):
    """Deterministic parameter init matching the torch module's shapes."""
    k1, k2, k3 = jax.random.split(key, 3)
    # input_layer.weight: (H, 1), orthogonal init -> unit-norm column vector
    w1 = jax.random.normal(k1, (hidden_size, 1), jnp.float32)
    w1 = w1 / jnp.linalg.norm(w1)
    # input_layer.bias: (H,), torch default U(-1/sqrt(in_features), +) = U(-1, 1)
    b1 = jax.random.uniform(k2, (hidden_size,), jnp.float32, -1.0, 1.0)
    # output_layer.weight: (1, H), torch default U(-1/sqrt(H), 1/sqrt(H))
    bound = 1.0 / jnp.sqrt(hidden_size)
    w2 = jax.random.uniform(k3, (1, hidden_size), jnp.float32, -bound, bound)
    return w1, b1, w2


def elm_reference(x, w1, b1, w2):
    # Elementwise f32 reference (avoids MXU default-precision effects).
    h = jnp.tanh(x * w1.reshape(1, -1) + b1[None, :])          # (N, H)
    return jnp.sum(h * w2.reshape(1, -1), axis=1, keepdims=True)


if __name__ == "__main__":
    key = jax.random.PRNGKey(0)
    kx, kp = jax.random.split(key)

    hidden_size = 8
    w1, b1, w2 = init_params(kp, hidden_size)

    # Case 1: lane-aligned batch (N % 128 == 0) -> zero-copy wrapper path,
    # 2-step grid (both TensorCores on v7x).
    N1 = 4096
    x1 = jax.random.normal(kx, (N1, 1), jnp.float32)
    out1 = jax.block_until_ready(enhanced_elm_forward(x1, w1, b1, w2))
    ref1 = elm_reference(x1, w1, b1, w2)
    assert out1.shape == (N1, 1), out1.shape
    assert jnp.allclose(out1, ref1, atol=1e-5, rtol=1e-5), (
        f"max abs err {jnp.max(jnp.abs(out1 - ref1))}")

    # Case 2: misaligned batch (fallback tail-pad path + ragged row blocks).
    N2 = 2000
    x2 = jax.random.normal(jax.random.fold_in(kx, 1), (N2, 1), jnp.float32)
    out2 = jax.block_until_ready(enhanced_elm_forward(x2, w1, b1, w2))
    ref2 = elm_reference(x2, w1, b1, w2)
    assert out2.shape == (N2, 1), out2.shape
    assert jnp.allclose(out2, ref2, atol=1e-5, rtol=1e-5), (
        f"max abs err {jnp.max(jnp.abs(out2 - ref2))}")

    print("KERNEL_OK")
</pallas_src>

<mosaic_0001>
module attributes {stable_mosaic.version = 11 : i64} {
  func.func @elm_kernel(%arg0: i32, %arg1: memref<3x8xf32, #tpu.memory_space<smem>>, %arg2: memref<16x128xf32, #tpu.memory_space<vmem>>, %arg3: memref<16x128xf32, #tpu.memory_space<vmem>>) attributes {dimension_semantics = [#tpu.dimension_semantics<parallel>], iteration_bounds = array<i64: 2>, scalar_prefetch = 1 : i64, scratch_operands = 0 : i64, tpu.core_type = #tpu.core_type<tc>, window_params = [{transform_indices = @transform_0, window_bounds = array<i64: 16, 128>}, {transform_indices = @transform_1, window_bounds = array<i64: 16, 128>}]} {
    %c0 = arith.constant 0 : index
    %c0_0 = arith.constant 0 : index
    %0 = vector.load %arg2[%c0, %c0_0] : memref<16x128xf32, #tpu.memory_space<vmem>>, vector<16x128xf32>
    %c2 = arith.constant 2 : index
    %c0_1 = arith.constant 0 : index
    %1 = memref.load %arg1[%c2, %c0_1] : memref<3x8xf32, #tpu.memory_space<smem>>
    %c0_2 = arith.constant 0 : index
    %c0_3 = arith.constant 0 : index
    %2 = memref.load %arg1[%c0_2, %c0_3] : memref<3x8xf32, #tpu.memory_space<smem>>
    %3 = vector.broadcast %2 : f32 to vector<16x128xf32>
    %4 = arith.mulf %0, %3 : vector<16x128xf32>
    %c1 = arith.constant 1 : index
    %c0_4 = arith.constant 0 : index
    %5 = memref.load %arg1[%c1, %c0_4] : memref<3x8xf32, #tpu.memory_space<smem>>
    %6 = vector.broadcast %5 : f32 to vector<16x128xf32>
    %7 = arith.addf %4, %6 : vector<16x128xf32>
    %8 = math.tanh %7 : vector<16x128xf32>
    %9 = vector.broadcast %1 : f32 to vector<16x128xf32>
    %10 = arith.mulf %9, %8 : vector<16x128xf32>
    %c2_5 = arith.constant 2 : index
    %c1_6 = arith.constant 1 : index
    %11 = memref.load %arg1[%c2_5, %c1_6] : memref<3x8xf32, #tpu.memory_space<smem>>
    %c0_7 = arith.constant 0 : index
    %c1_8 = arith.constant 1 : index
    %12 = memref.load %arg1[%c0_7, %c1_8] : memref<3x8xf32, #tpu.memory_space<smem>>
    %13 = vector.broadcast %12 : f32 to vector<16x128xf32>
    %14 = arith.mulf %0, %13 : vector<16x128xf32>
    %c1_9 = arith.constant 1 : index
    %c1_10 = arith.constant 1 : index
    %15 = memref.load %arg1[%c1_9, %c1_10] : memref<3x8xf32, #tpu.memory_space<smem>>
    %16 = vector.broadcast %15 : f32 to vector<16x128xf32>
    %17 = arith.addf %14, %16 : vector<16x128xf32>
    %18 = math.tanh %17 : vector<16x128xf32>
    %19 = vector.broadcast %11 : f32 to vector<16x128xf32>
    %20 = arith.mulf %19, %18 : vector<16x128xf32>
    %c2_11 = arith.constant 2 : index
    %c2_12 = arith.constant 2 : index
    %21 = memref.load %arg1[%c2_11, %c2_12] : memref<3x8xf32, #tpu.memory_space<smem>>
    %c0_13 = arith.constant 0 : index
    %c2_14 = arith.constant 2 : index
    %22 = memref.load %arg1[%c0_13, %c2_14] : memref<3x8xf32, #tpu.memory_space<smem>>
    %23 = vector.broadcast %22 : f32 to vector<16x128xf32>
    %24 = arith.mulf %0, %23 : vector<16x128xf32>
    %c1_15 = arith.constant 1 : index
    %c2_16 = arith.constant 2 : index
    %25 = memref.load %arg1[%c1_15, %c2_16] : memref<3x8xf32, #tpu.memory_space<smem>>
    %26 = vector.broadcast %25 : f32 to vector<16x128xf32>
    %27 = arith.addf %24, %26 : vector<16x128xf32>
    %28 = math.tanh %27 : vector<16x128xf32>
    %29 = vector.broadcast %21 : f32 to vector<16x128xf32>
    %30 = arith.mulf %29, %28 : vector<16x128xf32>
    %31 = arith.addf %10, %30 : vector<16x128xf32>
    %c2_17 = arith.constant 2 : index
    %c4 = arith.constant 4 : index
    %32 = memref.load %arg1[%c2_17, %c4] : memref<3x8xf32, #tpu.memory_space<smem>>
    %c0_18 = arith.constant 0 : index
    %c4_19 = arith.constant 4 : index
    %33 = memref.load %arg1[%c0_18, %c4_19] : memref<3x8xf32, #tpu.memory_space<smem>>
    %34 = vector.broadcast %33 : f32 to vector<16x128xf32>
    %35 = arith.mulf %0, %34 : vector<16x128xf32>
    %c1_20 = arith.constant 1 : index
    %c4_21 = arith.constant 4 : index
    %36 = memref.load %arg1[%c1_20, %c4_21] : memref<3x8xf32, #tpu.memory_space<smem>>
    %37 = vector.broadcast %36 : f32 to vector<16x128xf32>
    %38 = arith.addf %35, %37 : vector<16x128xf32>
    %39 = math.tanh %38 : vector<16x128xf32>
    %40 = vector.broadcast %32 : f32 to vector<16x128xf32>
    %41 = arith.mulf %40, %39 : vector<16x128xf32>
    %42 = arith.addf %31, %41 : vector<16x128xf32>
    %c2_22 = arith.constant 2 : index
    %c6 = arith.constant 6 : index
    %43 = memref.load %arg1[%c2_22, %c6] : memref<3x8xf32, #tpu.memory_space<smem>>
    %c0_23 = arith.constant 0 : index
    %c6_24 = arith.constant 6 : index
    %44 = memref.load %arg1[%c0_23, %c6_24] : memref<3x8xf32, #tpu.memory_space<smem>>
    %45 = vector.broadcast %44 : f32 to vector<16x128xf32>
    %46 = arith.mulf %0, %45 : vector<16x128xf32>
    %c1_25 = arith.constant 1 : index
    %c6_26 = arith.constant 6 : index
    %47 = memref.load %arg1[%c1_25, %c6_26] : memref<3x8xf32, #tpu.memory_space<smem>>
    %48 = vector.broadcast %47 : f32 to vector<16x128xf32>
    %49 = arith.addf %46, %48 : vector<16x128xf32>
    %50 = math.tanh %49 : vector<16x128xf32>
    %51 = vector.broadcast %43 : f32 to vector<16x128xf32>
    %52 = arith.mulf %51, %50 : vector<16x128xf32>
    %53 = arith.addf %42, %52 : vector<16x128xf32>
    %c2_27 = arith.constant 2 : index
    %c3 = arith.constant 3 : index
    %54 = memref.load %arg1[%c2_27, %c3] : memref<3x8xf32, #tpu.memory_space<smem>>
    %c0_28 = arith.constant 0 : index
    %c3_29 = arith.constant 3 : index
    %55 = memref.load %arg1[%c0_28, %c3_29] : memref<3x8xf32, #tpu.memory_space<smem>>
    %56 = vector.broadcast %55 : f32 to vector<16x128xf32>
    %57 = arith.mulf %0, %56 : vector<16x128xf32>
    %c1_30 = arith.constant 1 : index
    %c3_31 = arith.constant 3 : index
    %58 = memref.load %arg1[%c1_30, %c3_31] : memref<3x8xf32, #tpu.memory_space<smem>>
    %59 = vector.broadcast %58 : f32 to vector<16x128xf32>
    %60 = arith.addf %57, %59 : vector<16x128xf32>
    %61 = math.tanh %60 : vector<16x128xf32>
    %62 = vector.broadcast %54 : f32 to vector<16x128xf32>
    %63 = arith.mulf %62, %61 : vector<16x128xf32>
    %64 = arith.addf %20, %63 : vector<16x128xf32>
    %c2_32 = arith.constant 2 : index
    %c5 = arith.constant 5 : index
    %65 = memref.load %arg1[%c2_32, %c5] : memref<3x8xf32, #tpu.memory_space<smem>>
    %c0_33 = arith.constant 0 : index
    %c5_34 = arith.constant 5 : index
    %66 = memref.load %arg1[%c0_33, %c5_34] : memref<3x8xf32, #tpu.memory_space<smem>>
    %67 = vector.broadcast %66 : f32 to vector<16x128xf32>
    %68 = arith.mulf %0, %67 : vector<16x128xf32>
    %c1_35 = arith.constant 1 : index
    %c5_36 = arith.constant 5 : index
    %69 = memref.load %arg1[%c1_35, %c5_36] : memref<3x8xf32, #tpu.memory_space<smem>>
    %70 = vector.broadcast %69 : f32 to vector<16x128xf32>
    %71 = arith.addf %68, %70 : vector<16x128xf32>
    %72 = math.tanh %71 : vector<16x128xf32>
    %73 = vector.broadcast %65 : f32 to vector<16x128xf32>
    %74 = arith.mulf %73, %72 : vector<16x128xf32>
    %75 = arith.addf %64, %74 : vector<16x128xf32>
    %c2_37 = arith.constant 2 : index
    %c7 = arith.constant 7 : index
    %76 = memref.load %arg1[%c2_37, %c7] : memref<3x8xf32, #tpu.memory_space<smem>>
    %c0_38 = arith.constant 0 : index
    %c7_39 = arith.constant 7 : index
    %77 = memref.load %arg1[%c0_38, %c7_39] : memref<3x8xf32, #tpu.memory_space<smem>>
    %78 = vector.broadcast %77 : f32 to vector<16x128xf32>
    %79 = arith.mulf %0, %78 : vector<16x128xf32>
    %c1_40 = arith.constant 1 : index
    %c7_41 = arith.constant 7 : index
    %80 = memref.load %arg1[%c1_40, %c7_41] : memref<3x8xf32, #tpu.memory_space<smem>>
    %81 = vector.broadcast %80 : f32 to vector<16x128xf32>
    %82 = arith.addf %79, %81 : vector<16x128xf32>
    %83 = math.tanh %82 : vector<16x128xf32>
    %84 = vector.broadcast %76 : f32 to vector<16x128xf32>
    %85 = arith.mulf %84, %83 : vector<16x128xf32>
    %86 = arith.addf %75, %85 : vector<16x128xf32>
    %87 = arith.addf %53, %86 : vector<16x128xf32>
    %c0_42 = arith.constant 0 : index
    %c0_43 = arith.constant 0 : index
    %88 = vector.load %arg3[%c0_42, %c0_43] : memref<16x128xf32, #tpu.memory_space<vmem>>, vector<16x128xf32>
    tpu.vector_store %arg3[%c0_42, %c0_43], %87 {strides = array<i32>} : memref<16x128xf32, #tpu.memory_space<vmem>>, vector<16x128xf32>,
    return
  }
  func.func @transform_0(%arg0: i32, %arg1: memref<3x8xf32, #tpu.memory_space<smem>>) -> (i32, i32) {
    %c0_i32 = arith.constant 0 : i32
    %c0_i32_0 = arith.constant 0 : i32
    return %arg0, %c0_i32 : i32, i32
  }
  func.func @transform_1(%arg0: i32, %arg1: memref<3x8xf32, #tpu.memory_space<smem>>) -> (i32, i32) {
    %c0_i32 = arith.constant 0 : i32
    %c0_i32_0 = arith.constant 0 : i32
    return %arg0, %c0_i32 : i32, i32
  }
}

</mosaic_0001>

<llo_original>
// kernel: tpu_custom_call.1
$region0: #{tpu_custom_call.1}
  #allocation0 [shape = 'u32[]', space=smem, size = 0x4, offset = 0x4, fixed_abs, tag = 'smem constant byte address 0x4 - core index']
  #allocation1 [shape = 'u32[144,128]{1,0:T(1,128)}', space=vmem, size = 0x12000, scoped, tag = 'internal scratch']
  #allocation2 [shape = 's32[1]{0}', space=sflag, size = 0x4, scoped, tag = 'scoped memory for tpu_custom_call.1']
  #allocation3 [shape = 'u8[2048]{0}', space=smem, size = 0x800, scoped, tag = 'prefetched SMEM operand 0']
  %s0 = inlined_call_operand.hbm [shape: f32[3,8], index: 0, kind: input, shape index: {}]
  %s1 = inlined_call_operand.hbm [shape: f32[32,128], index: 1, kind: input, shape index: {}]
  %s2 = inlined_call_operand.hbm [shape: f32[32,128], index: 2, kind: output, shape index: {}]
  %s3 = sld [smem:[#allocation0]]
  $region41: #{tpu_custom_call.1} parent=0
    _
  %s5 = ssub.s32 1, %s3
  %s6 = scalar_select 0, %s5, %s3
  %8 = dma.hbm_to_smem %s0, 64, [#allocation3], [#allocation2]
  %9 = dma.done [#allocation2], 64
  %10 = sfence
  $region1: #{tpu_custom_call.1} parent=0
    #allocation4 [shape = 'u8[16384]{0}', space=vmem, size = 0x4000, scoped, tag = 'input window, operand 1']
    #allocation5 [shape = 's32[2]{0}', space=sflag, size = 0x8, scoped, tag = 'scoped memory for tpu_custom_call.1']
    #allocation6 [shape = 's32[2]{0}', space=sflag, size = 0x8, scoped, tag = 'scoped memory for tpu_custom_call.1']
    #allocation7 [shape = 'u8[16384]{0}', space=vmem, size = 0x4000, scoped, tag = 'output window, operand 0']
    %11 = vsyncpa [#allocation5], 0
    %s12 = scalar_lea.sflag [#allocation5], 1
    %13 = vsyncpa %s12, 0
    %14 = vsyncpa [#allocation6], 0
    %s15 = scalar_lea.sflag [#allocation6], 1
    %16 = vsyncpa %s15, 0
    loop: start=0, step=1, limit=4
    $region2: #{tpu_custom_call.1} parent=1 // loop_pre_header
      _
    $region3: #{tpu_custom_call.1} parent=1 // loop_header
      %s18 = sphi 0, %s22
      %p19 = scmp.ge.s32.totalorder %s18, 4
      %s28 = sphi 0, %s30
      %s31 = sphi 0, %s28
      %s32 = sphi 0, %s31
      %s48 = sphi 0, %s32
      %s54 = sphi 0, %s56
      %s57 = sphi 0, %s54
      %s58 = sphi 0, %s57
      %s74 = sphi 0, %s58
    $region4: #{tpu_custom_call.1} parent=1 // loop_header_branch
      %21 = sbr.rel (%p19) target = $region8
    $region5: #{tpu_custom_call.1} parent=1 // loop_body
      %s23 = ssub.s32 %s18, 1
      %s24 = ssub.s32 %s18, 2
      %s25 = sadd.s32 %s18, 1
      %s26 = ssub.s32 %s18, %s25
      %p27 = scmp.eq.s32.totalorder %s26, 0
      %s29 = sadd.s32 %s28, 1
      %s30 = scalar_select %p27, %s28, %s29
      %p33 = pneg %p27
      %p34 = scmp.eq.s32.totalorder %s18, 1
      %p35 = por %p33, %p34
      %p36 = scmp.ne.s32.totalorder %s28, %s31
      %p37 = scmp.eq.s32.totalorder %s18, 0
      %p38 = por %p36, %p37
      %p39 = scmp.ne.s32.totalorder %s28, %s31
      %p40 = scmp.eq.s32.totalorder %s23, 1
      %p41 = por %p39, %p40
      %p42 = scmp.ne.s32.totalorder %s31, %s32
      %p43 = scmp.eq.s32.totalorder %s23, 0
      %p44 = por %p42, %p43
      %p45 = scmp.ne.s32.totalorder %s31, %s32
      %p46 = scmp.eq.s32.totalorder %s24, 1
      %p47 = por %p45, %p46
      %p49 = scmp.ne.s32.totalorder %s32, %s48
      %p50 = scmp.eq.s32.totalorder %s24, 0
      %p51 = por %p49, %p50
      %s52 = ssub.s32 %s18, %s25
      %p53 = scmp.eq.s32.totalorder %s52, 0
      %s55 = sadd.s32 %s54, 1
      %s56 = scalar_select %p53, %s54, %s55
      %p59 = pneg %p53
      %p60 = scmp.eq.s32.totalorder %s18, 1
      %p61 = por %p59, %p60
      %p62 = scmp.ne.s32.totalorder %s54, %s57
      %p63 = scmp.eq.s32.totalorder %s18, 0
      %p64 = por %p62, %p63
      %p65 = scmp.ne.s32.totalorder %s54, %s57
      %p66 = scmp.eq.s32.totalorder %s23, 1
      %p67 = por %p65, %p66
      %p68 = scmp.ne.s32.totalorder %s57, %s58
      %p69 = scmp.eq.s32.totalorder %s23, 0
      %p70 = por %p68, %p69
      %p71 = scmp.ne.s32.totalorder %s57, %s58
      %p72 = scmp.eq.s32.totalorder %s24, 1
      %p73 = por %p71, %p72
      %p75 = scmp.ne.s32.totalorder %s58, %s74
      %p76 = scmp.eq.s32.totalorder %s24, 0
      %p77 = por %p75, %p76
      %p78 = scmp.le.s32.totalorder 1, %s18
      %p79 = scmp.lt.s32.totalorder %s18, 3
      %p80 = pnand %p78, %p79
      %p81 = pneg %p80
      // Predicated region
      $region9: #{tpu_custom_call.1} parent=5 // pred_check
        _
      $region10: #{tpu_custom_call.1} parent=5 // pred_check_branch
        %83 = sbr.rel (%p80) target = $region12
      $region11: #{tpu_custom_call.1} parent=5 // pred_region
        %s84 = ssub.s32 %s18, 1
      $region12: #{tpu_custom_call.1} parent=5 // pred_fallthru
        _
      %p85 = scmp.lt.s32.totalorder %s18, 2
      // Predicated region
      $region13: #{tpu_custom_call.1} parent=5 // pred_check
        %p86 = pneg %p85
      $region14: #{tpu_custom_call.1} parent=5 // pred_check_branch
        %88 = sbr.rel (%p86) target = $region16
      $region15: #{tpu_custom_call.1} parent=5 // pred_region
        // Predicated region
        $region17: #{tpu_custom_call.1} parent=15 // pred_check
          %p89 = pneg %p38
        $region18: #{tpu_custom_call.1} parent=15 // pred_check_branch
          %91 = sbr.rel (%p89) target = $region20
        $region19: #{tpu_custom_call.1} parent=15 // pred_region
          %s92 = sand.u32 %s28, 1
          %s93 = scalar_lea.sflag [#allocation5], %s92
          %s94 = sand.u32 %s28, 1
          %s95 = smul.addr %s94, 16
          %s96 = scalar_lea.vmem [#allocation4], %s95
          %s97 = smul.u32 2, %s18
          %s99 = ssub.s32 256, 256
          %100 = vsyncadd %s93, %s99
          %s101 = smul.addr %s97, 128
          %s102 = scalar_lea.hbm %s1, %s101
          %s103 = sshll.u32 %s96, 4
          %s104 = int_to_ptr.vmem [resolvable:$true] %s103
          %109 = dma.hbm_to_vmem [thread:$0]  %s102, 256, %s104, %s93, 128, 128, 8
        $region20: #{tpu_custom_call.1} parent=15 // pred_fallthru
          _
      $region16: #{tpu_custom_call.1} parent=5 // pred_fallthru
        _
      %p110 = scmp.le.s32.totalorder 1, %s18
      %p111 = scmp.lt.s32.totalorder %s18, 3
      %p112 = pnand %p110, %p111
      %p113 = pneg %p112
      // Predicated region
      $region21: #{tpu_custom_call.1} parent=5 // pred_check
        _
      $region22: #{tpu_custom_call.1} parent=5 // pred_check_branch
        %115 = sbr.rel (%p112) target = $region24
      $region23: #{tpu_custom_call.1} parent=5 // pred_region
        %s116 = ssub.s32 %s18, 1
        %s117 = sand.u32 %s31, 1
        %s118 = scalar_lea.sflag [#allocation5], %s117
        %s119 = sand.u32 %s31, 1
        %s120 = smul.addr %s119, 16
        %s121 = scalar_lea.vmem [#allocation4], %s120
        // Predicated region
        $region25: #{tpu_custom_call.1} parent=23 // pred_check
          %p122 = pneg %p44
        $region26: #{tpu_custom_call.1} parent=23 // pred_check_branch
          %124 = sbr.rel (%p122) target = $region28
        $region27: #{tpu_custom_call.1} parent=23 // pred_region
          %125 = dma.done %s118, 256
        $region28: #{tpu_custom_call.1} parent=23 // pred_fallthru
          _
        %s126 = sand.u32 %s31, 1
        %s127 = scalar_lea.sflag [#allocation5], %s126
        %s128 = sand.u32 %s31, 1
        %s129 = smul.addr %s128, 16
        %s130 = scalar_lea.vmem [#allocation4], %s129
        %p131 = pneg %p44
        %p132 = pneg %p41
        %p133 = pneg %p70
        %p134 = pneg %p67
        %s135 = sand.u32 %s57, 1
        %s136 = scalar_lea.sflag [#allocation6], %s135
        %s137 = sand.u32 %s57, 1
        %s138 = smul.addr %s137, 16
        %s139 = scalar_lea.vmem [#allocation7], %s138
        %s140 = smul.u32 2, %s23
        %s141 = smul.u32 2, %s23
        %v142 = vld [vmem:[%s121] sm:$0xff]
        %v143 = vld [vmem:[%s121 + $0x8] sm:$0xff]
        %s144 = sld [smem:[#allocation3 + $0x100]]
        %s145 = sld [smem:[#allocation3]]
        %v146 = vstv %s145
        %v147 = vmul.f32 %v142, %v146
        %v148 = vmul.f32 %v143, %v146
        %s149 = sld [smem:[#allocation3 + $0x80]]
        %v150 = vstv %s149
        %v151 = vadd.f32 %v147, %v150
        %v152 = vadd.f32 %v148, %v150
        %v153 = vtanh.pop %v151
        %v154 = vtanh.pop %v152
        %v155 = vstv %s144
        %v156 = vmul.f32 %v155, %v153
        %v157 = vmul.f32 %v155, %v154
        %s158 = sld [smem:[#allocation3 + $0x101]]
        %s159 = sld [smem:[#allocation3 + $0x1]]
        %v160 = vstv %s159
        %v161 = vmul.f32 %v142, %v160
        %v162 = vmul.f32 %v143, %v160
        %s163 = sld [smem:[#allocation3 + $0x81]]
        %v164 = vstv %s163
        %v165 = vadd.f32 %v161, %v164
        %v166 = vadd.f32 %v162, %v164
        %v167 = vtanh.pop %v165
        %v168 = vtanh.pop %v166
        %v169 = vstv %s158
        %v170 = vmul.f32 %v169, %v167
        %v171 = vmul.f32 %v169, %v168
        %s172 = sld [smem:[#allocation3 + $0x102]]
        %s173 = sld [smem:[#allocation3 + $0x2]]
        %v174 = vstv %s173
        %v175 = vmul.f32 %v142, %v174
        %v176 = vmul.f32 %v143, %v174
        %s177 = sld [smem:[#allocation3 + $0x82]]
        %v178 = vstv %s177
        %v179 = vadd.f32 %v175, %v178
        %v180 = vadd.f32 %v176, %v178
        %v181 = vtanh.pop %v179
        %v182 = vtanh.pop %v180
        %v183 = vstv %s172
        %v184 = vmul.f32 %v183, %v181
        %v185 = vmul.f32 %v183, %v182
        %v186 = vadd.f32 %v156, %v184
        %v187 = vadd.f32 %v157, %v185
        %s188 = sld [smem:[#allocation3 + $0x104]]
        %s189 = sld [smem:[#allocation3 + $0x4]]
        %v190 = vstv %s189
        %v191 = vmul.f32 %v142, %v190
        %v192 = vmul.f32 %v143, %v190
        %s193 = sld [smem:[#allocation3 + $0x84]]
        %v194 = vstv %s193
        %v195 = vadd.f32 %v191, %v194
        %v196 = vadd.f32 %v192, %v194
        %v197 = vtanh.pop %v195
        %v198 = vtanh.pop %v196
        %v199 = vstv %s188
        %v200 = vmul.f32 %v199, %v197
        %v201 = vmul.f32 %v199, %v198
        %v202 = vadd.f32 %v186, %v200
        %v203 = vadd.f32 %v187, %v201
        %s204 = sld [smem:[#allocation3 + $0x106]]
        %s205 = sld [smem:[#allocation3 + $0x6]]
        %v206 = vstv %s205
        %v207 = vmul.f32 %v142, %v206
        %v208 = vmul.f32 %v143, %v206
        %s209 = sld [smem:[#allocation3 + $0x86]]
        %v210 = vstv %s209
        %v211 = vadd.f32 %v207, %v210
        %v212 = vadd.f32 %v208, %v210
        %v213 = vtanh.pop %v211
        %v214 = vtanh.pop %v212
        %v215 = vstv %s204
        %v216 = vmul.f32 %v215, %v213
        %v217 = vmul.f32 %v215, %v214
        %v218 = vadd.f32 %v202, %v216
        %v219 = vadd.f32 %v203, %v217
        %s220 = sld [smem:[#allocation3 + $0x103]]
        %s221 = sld [smem:[#allocation3 + $0x3]]
        %v222 = vstv %s221
        %v223 = vmul.f32 %v142, %v222
        %v224 = vmul.f32 %v143, %v222
        %s225 = sld [smem:[#allocation3 + $0x83]]
        %v226 = vstv %s225
        %v227 = vadd.f32 %v223, %v226
        %v228 = vadd.f32 %v224, %v226
        %v229 = vtanh.pop %v227
        %v230 = vtanh.pop %v228
        %v231 = vstv %s220
        %v232 = vmul.f32 %v231, %v229
        %v233 = vmul.f32 %v231, %v230
        %v234 = vadd.f32 %v170, %v232
        %v235 = vadd.f32 %v171, %v233
        %s236 = sld [smem:[#allocation3 + $0x105]]
        %s237 = sld [smem:[#allocation3 + $0x5]]
        %v238 = vstv %s237
        %v239 = vmul.f32 %v142, %v238
        %v240 = vmul.f32 %v143, %v238
        %s241 = sld [smem:[#allocation3 + $0x85]]
        %v242 = vstv %s241
        %v243 = vadd.f32 %v239, %v242
        %v244 = vadd.f32 %v240, %v242
        %v245 = vtanh.pop %v243
        %v246 = vtanh.pop %v244
        %v247 = vstv %s236
        %v248 = vmul.f32 %v247, %v245
        %v249 = vmul.f32 %v247, %v246
        %v250 = vadd.f32 %v234, %v248
        %v251 = vadd.f32 %v235, %v249
        %s252 = sld [smem:[#allocation3 + $0x107]]
        %s253 = sld [smem:[#allocation3 + $0x7]]
        %v254 = vstv %s253
        %v255 = vmul.f32 %v142, %v254
        %v256 = vmul.f32 %v143, %v254
        %s257 = sld [smem:[#allocation3 + $0x87]]
        %v258 = vstv %s257
        %v259 = vadd.f32 %v255, %v258
        %v260 = vadd.f32 %v256, %v258
        %v261 = vtanh.pop %v259
        %v262 = vtanh.pop %v260
        %v263 = vstv %s252
        %v264 = vmul.f32 %v263, %v261
        %v265 = vmul.f32 %v263, %v262
        %v266 = vadd.f32 %v250, %v264
        %v267 = vadd.f32 %v251, %v265
        %v268 = vadd.f32 %v218, %v266
        %v269 = vadd.f32 %v219, %v267
        %270 = vst [vmem:[%s139] sm:$0xff] %v268
        %271 = vst [vmem:[%s139 + $0x8] sm:$0xff] %v269
        %s272 = sand.u32 %s57, 1
        %s273 = scalar_lea.sflag [#allocation6], %s272
        %s274 = sand.u32 %s57, 1
        %s275 = smul.addr %s274, 16
        %s276 = scalar_lea.vmem [#allocation7], %s275
        // Predicated region
        $region29: #{tpu_custom_call.1} parent=23 // pred_check
          %p277 = pneg %p67
        $region30: #{tpu_custom_call.1} parent=23 // pred_check_branch
          %279 = sbr.rel (%p277) target = $region32
        $region31: #{tpu_custom_call.1} parent=23 // pred_region
          %s280 = smul.u32 2, %s23
          %s282 = ssub.s32 256, 256
          %283 = vsyncadd %s273, %s282
          %s284 = smul.addr %s280, 128
          %s285 = scalar_lea.hbm %s2, %s284
          %s286 = sshll.u32 %s276, 4
          %s287 = int_to_ptr.vmem [resolvable:$true] %s286
          %292 = dma.vmem_to_hbm [thread:$0]  %s287, 256, %s285, %s273, 128, 128, 8
        $region32: #{tpu_custom_call.1} parent=23 // pred_fallthru
          _
      $region24: #{tpu_custom_call.1} parent=5 // pred_fallthru
        _
      %p293 = scmp.le.s32.totalorder 2, %s18
      // Predicated region
      $region33: #{tpu_custom_call.1} parent=5 // pred_check
        %p294 = pneg %p293
      $region34: #{tpu_custom_call.1} parent=5 // pred_check_branch
        %296 = sbr.rel (%p294) target = $region36
      $region35: #{tpu_custom_call.1} parent=5 // pred_region
        %s297 = ssub.s32 %s18, 2
        // Predicated region
        $region37: #{tpu_custom_call.1} parent=35 // pred_check
          %p298 = pneg %p73
        $region38: #{tpu_custom_call.1} parent=35 // pred_check_branch
          %300 = sbr.rel (%p298) target = $region40
        $region39: #{tpu_custom_call.1} parent=35 // pred_region
          %s301 = sand.u32 %s58, 1
          %s302 = scalar_lea.sflag [#allocation6], %s301
          %s303 = sand.u32 %s58, 1
          %s304 = smul.addr %s303, 16
          %s305 = scalar_lea.vmem [#allocation7], %s304
          %306 = dma.done %s302, 256
        $region40: #{tpu_custom_call.1} parent=35 // pred_fallthru
          _
      $region36: #{tpu_custom_call.1} parent=5 // pred_fallthru
        _
    $region6: #{tpu_custom_call.1} parent=1 // loop_footer
      %s22 = sadd.s32 1, %s18
    $region7: #{tpu_custom_call.1} parent=1 // loop_footer_branch
      %17 = sbr.rel target = $region3
    $region8: #{tpu_custom_call.1} parent=1 // loop_exit
      _
    %307 = vsyncpa [#allocation5], 1
    %s308 = scalar_lea.sflag [#allocation5], 1
    %309 = vsyncpa %s308, 1
    %310 = vsyncpa [#allocation6], 1
    %s311 = scalar_lea.sflag [#allocation6], 1
    %312 = vsyncpa %s311, 1

</llo_original>
